<compile_context>
chip_gen: v7x
topology: tpu7x:2x2x1
jax: 0.10.0
libtpu: 0.0.40
codegen_flags: <defaults>
</compile_context>

<pallas_src>
from typing import NamedTuple

import jax
import jax.numpy as jnp
from jax.experimental import pallas as pl
from jax.experimental.pallas import tpu as pltpu


def _round_up(x, m):
    return (x + m - 1) // m * m


class FusedPredictorParams(NamedTuple):
    """Init-time fused parameters for the Fast R-CNN predictor head."""
    w_fused: jax.Array   # [C, Kp + Bp]  (compute dtype)
    b_fused: jax.Array   # [1, Kp + Bp]  float32
    num_classes: int     # K
    kp: int              # round_up(K, 128)
    bp: int              # round_up(4K, 128)


def fuse_fast_rcnn_params(w_cls_t, b_cls, w_bbox_t, b_bbox,
                          *, compute_dtype=jnp.float32):
    """One-time fusion of the two Linear layers into a single lane-padded weight.

    w_cls_t:  [C, K]   (nn.Linear cls weight, pre-transposed)
    b_cls:    [K]
    w_bbox_t: [C, 4K]  (nn.Linear bbox weight, pre-transposed)
    b_bbox:   [4K]
    compute_dtype: dtype fed to the MXU (f32 = exact PyTorch semantics,
                   bf16 = fast path; accumulation is f32 either way).
    """
    c, k = w_cls_t.shape
    k4 = w_bbox_t.shape[1]
    assert w_bbox_t.shape[0] == c and k4 == 4 * k
    assert b_cls.shape == (k,) and b_bbox.shape == (k4,)

    kp = _round_up(k, 128)
    bp = _round_up(k4, 128)

    w = jnp.zeros((c, kp + bp), jnp.float32)
    w = w.at[:, :k].set(w_cls_t.astype(jnp.float32))
    w = w.at[:, kp:kp + k4].set(w_bbox_t.astype(jnp.float32))

    b = jnp.zeros((1, kp + bp), jnp.float32)
    b = b.at[0, :k].set(b_cls.astype(jnp.float32))
    b = b.at[0, kp:kp + k4].set(b_bbox.astype(jnp.float32))

    return FusedPredictorParams(w.astype(compute_dtype), b, k, kp, bp)


def _predictor_kernel(x_ref, w_ref, b_ref, scores_ref, bbox_ref):
    # One fused MXU pass: [tm, C] @ [C, Kp+Bp] with f32 accumulation and f32
    # bias added before the final cast.  The split at Kp is a 128-aligned lane
    # boundary, so both stores are lane-dense unmasked `vst`.
    acc = jnp.dot(x_ref[...], w_ref[...], preferred_element_type=jnp.float32)
    acc = acc + b_ref[...]
    kp = scores_ref.shape[-1]
    scores_ref[...] = acc[:, :kp].astype(scores_ref.dtype)
    bbox_ref[...] = acc[:, kp:].astype(bbox_ref.dtype)


def _default_block_n():
    # v5e: 4x128x128 MXU & ~0.82 TB/s HBM -> match the 128-wide native shape.
    # v6e/v7x: bigger tiles get closer to the HBM roofline (~85% at 512).
    try:
        kind = jax.devices()[0].device_kind.lower()
    except Exception:
        return 512
    if "v5 lite" in kind or "v5e" in kind or "v5lite" in kind:
        return 128
    return 512


def fast_rcnn_predictor(x, params: FusedPredictorParams, *, block_n=None,
                        out_dtype=jnp.float32, return_padded=False):
    """Fast R-CNN predictor head forward pass.

    x:      [N, C, 1, 1] (NCHW) or [N, C]
    params: FusedPredictorParams from fuse_fast_rcnn_params (init-time).
    Returns (scores [N, K], bbox_deltas [N, 4K]); with return_padded=True the
    lane-padded [N, Kp] / [N, Bp] slabs are returned instead (no slice copies).
    """
    if x.ndim == 4:
        assert x.shape[2:] == (1, 1), (
            f"x has the wrong shape, expecting the last two dimensions to be "
            f"[1,1] instead of {list(x.shape[2:])}"
        )
    x2d = x.reshape(x.shape[0], -1)  # flatten(start_dim=1)
    n, c = x2d.shape
    k, kp, bp = params.num_classes, params.kp, params.bp
    out_p = kp + bp
    assert params.w_fused.shape == (c, out_p)

    x_in = x2d.astype(params.w_fused.dtype)

    # ---- Row tile: per-chip default, >=2 grid steps when N allows (so the
    # ---- "parallel" axis actually uses both v7x TensorCores), multiple of 16
    # ---- for clean bf16 sublane packing.  No row padding: Pallas masks the
    # ---- ragged last tile (padded reads, dropped OOB writes).
    if block_n is None:
        block_n = _default_block_n()
    tm = min(block_n, _round_up(pl.cdiv(max(n, 1), 2), 16))
    grid = (pl.cdiv(n, tm),)

    in_itemsize = jnp.dtype(params.w_fused.dtype).itemsize
    out_itemsize = jnp.dtype(out_dtype).itemsize
    cost = pl.CostEstimate(
        flops=2 * n * c * out_p,
        transcendentals=0,
        bytes_accessed=(n * c * in_itemsize          # x
                        + c * out_p * in_itemsize    # fused weight (read once)
                        + out_p * 4                  # fused bias
                        + n * out_p * out_itemsize), # outputs
    )

    const_idx = lambda i: (0, 0)
    scores_pad, bbox_pad = pl.pallas_call(
        _predictor_kernel,
        out_shape=(jax.ShapeDtypeStruct((n, kp), out_dtype),
                   jax.ShapeDtypeStruct((n, bp), out_dtype)),
        grid_spec=pltpu.PrefetchScalarGridSpec(
            num_scalar_prefetch=0,
            grid=grid,
            in_specs=[
                # x row tile: default double-buffered pipelining.
                pl.BlockSpec((tm, c), lambda i: (i, 0)),
                # Fused weight & bias: constant index_map -> VMEM-resident;
                # single-buffered (never re-fetched), halves their footprint.
                pl.BlockSpec((c, out_p), const_idx, pipeline_mode=pl.Buffered(1)),
                pl.BlockSpec((1, out_p), const_idx, pipeline_mode=pl.Buffered(1)),
            ],
            out_specs=[
                pl.BlockSpec((tm, kp), lambda i: (i, 0)),
                pl.BlockSpec((tm, bp), lambda i: (i, 0)),
            ],
        ),
        compiler_params=pltpu.CompilerParams(
            dimension_semantics=("parallel",),  # shard row tiles across v7x's 2 TCs
        ),
        cost_estimate=cost,
    )(x_in, params.w_fused, params.b_fused)

    if return_padded:
        return scores_pad, bbox_pad
    # Final column strip to the exact PyTorch shapes (small copy; avoid it by
    # passing return_padded=True when the consumer can index the padded slabs).
    return scores_pad[:, :k], bbox_pad[:, :4 * k]


if __name__ == "__main__":
    # Deterministic synthetic parameters/inputs (small demo shapes).
    batch = 2
    in_channels = 32
    num_classes = 5

    key = jax.random.PRNGKey(0)
    kx, kw1, kb1, kw2, kb2 = jax.random.split(key, 5)

    # Input as NCHW with spatial [1, 1], as Fast R-CNN's box head expects.
    x = jax.random.normal(kx, (batch, in_channels, 1, 1), dtype=jnp.float32)

    # nn.Linear(in_channels, num_classes): weight [K, C] -> stored transposed [C, K].
    w_cls_t = 0.05 * jax.random.normal(kw1, (in_channels, num_classes), jnp.float32)
    b_cls = 0.05 * jax.random.normal(kb1, (num_classes,), jnp.float32)
    # nn.Linear(in_channels, num_classes * 4): weight [4K, C] -> transposed [C, 4K].
    w_bbox_t = 0.05 * jax.random.normal(kw2, (in_channels, num_classes * 4), jnp.float32)
    b_bbox = 0.05 * jax.random.normal(kb2, (num_classes * 4,), jnp.float32)

    # Pure-JAX reference.
    x2d = x.reshape(batch, -1)
    ref_scores = x2d @ w_cls_t + b_cls
    ref_bbox = x2d @ w_bbox_t + b_bbox

    # Exact f32 path (matches the PyTorch module) -> tight tolerance.
    params_f32 = fuse_fast_rcnn_params(
        w_cls_t, b_cls, w_bbox_t, b_bbox, compute_dtype=jnp.float32)
    scores, bbox_deltas = fast_rcnn_predictor(x, params_f32)
    jax.block_until_ready((scores, bbox_deltas))
    assert scores.shape == (batch, num_classes)
    assert bbox_deltas.shape == (batch, num_classes * 4)
    assert jnp.allclose(scores, ref_scores, atol=1e-5)
    assert jnp.allclose(bbox_deltas, ref_bbox, atol=1e-5)

    # Explicit opt-in fast bf16 MXU path (f32 accumulate + f32 bias) -> relaxed tol.
    params_bf16 = fuse_fast_rcnn_params(
        w_cls_t, b_cls, w_bbox_t, b_bbox, compute_dtype=jnp.bfloat16)
    scores16, bbox16 = fast_rcnn_predictor(x, params_bf16)
    jax.block_until_ready((scores16, bbox16))
    assert jnp.allclose(scores16, ref_scores, atol=2e-2)
    assert jnp.allclose(bbox16, ref_bbox, atol=2e-2)

    # Padded-slab path (no post-kernel slice copies) also agrees on valid columns.
    sp, bp_ = fast_rcnn_predictor(x, params_f32, return_padded=True)
    jax.block_until_ready((sp, bp_))
    assert jnp.allclose(sp[:, :num_classes], ref_scores, atol=1e-5)
    assert jnp.allclose(bp_[:, :num_classes * 4], ref_bbox, atol=1e-5)

    print("KERNEL_OK")
</pallas_src>

<mosaic_0001>
module attributes {stable_mosaic.version = 11 : i64} {
  func.func @_predictor_kernel(%arg0: i32, %arg1: memref<16x32xf32, #tpu.memory_space<vmem>>, %arg2: memref<32x256xf32, #tpu.memory_space<vmem>>, %arg3: memref<1x256xf32, #tpu.memory_space<vmem>>, %arg4: memref<16x128xf32, #tpu.memory_space<vmem>>, %arg5: memref<16x128xf32, #tpu.memory_space<vmem>>) attributes {dimension_semantics = [#tpu.dimension_semantics<parallel>], iteration_bounds = array<i64: 1>, scalar_prefetch = 0 : i64, scratch_operands = 0 : i64, tpu.core_type = #tpu.core_type<tc>, window_params = [{transform_indices = @transform_0, window_bounds = array<i64: 16, 32>}, {pipeline_mode = #tpu.pipeline_mode<synchronous>, transform_indices = @transform_1, window_bounds = array<i64: 32, 256>}, {pipeline_mode = #tpu.pipeline_mode<synchronous>, transform_indices = @transform_2, window_bounds = array<i64: 1, 256>}, {transform_indices = @transform_3, window_bounds = array<i64: 16, 128>}, {transform_indices = @transform_4, window_bounds = array<i64: 16, 128>}]} {
    %c0 = arith.constant 0 : index
    %c0_0 = arith.constant 0 : index
    %0 = vector.load %arg1[%c0, %c0_0] : memref<16x32xf32, #tpu.memory_space<vmem>>, vector<16x32xf32>
    %c0_1 = arith.constant 0 : index
    %c0_2 = arith.constant 0 : index
    %1 = vector.load %arg2[%c0_1, %c0_2] : memref<32x256xf32, #tpu.memory_space<vmem>>, vector<32x256xf32>
    %cst = arith.constant dense<0.000000e+00> : vector<16x256xf32>
    %2 = tpu.matmul %0, %1, %cst {dimension_numbers = #tpu.dot_dimension_numbers<[1], [0], [0], [1], [0, 0, 1, 1], [], []>} : vector<16x32xf32>, vector<32x256xf32>, vector<16x256xf32> -> vector<16x256xf32>
    %c0_3 = arith.constant 0 : index
    %c0_4 = arith.constant 0 : index
    %3 = vector.load %arg3[%c0_3, %c0_4] : memref<1x256xf32, #tpu.memory_space<vmem>>, vector<1x256xf32>
    %4 = vector.broadcast %3 : vector<1x256xf32> to vector<16x256xf32>
    %5 = arith.addf %2, %4 : vector<16x256xf32>
    %6 = vector.extract_strided_slice %5 {offsets = [0, 0], sizes = [16, 128], strides = [1, 1]} : vector<16x256xf32> to vector<16x128xf32>
    %c0_5 = arith.constant 0 : index
    %c0_6 = arith.constant 0 : index
    %7 = vector.load %arg4[%c0_5, %c0_6] : memref<16x128xf32, #tpu.memory_space<vmem>>, vector<16x128xf32>
    tpu.vector_store %arg4[%c0_5, %c0_6], %6 {strides = array<i32>} : memref<16x128xf32, #tpu.memory_space<vmem>>, vector<16x128xf32>,
    %8 = vector.extract_strided_slice %5 {offsets = [0, 128], sizes = [16, 128], strides = [1, 1]} : vector<16x256xf32> to vector<16x128xf32>
    %c0_7 = arith.constant 0 : index
    %c0_8 = arith.constant 0 : index
    %9 = vector.load %arg5[%c0_7, %c0_8] : memref<16x128xf32, #tpu.memory_space<vmem>>, vector<16x128xf32>
    tpu.vector_store %arg5[%c0_7, %c0_8], %8 {strides = array<i32>} : memref<16x128xf32, #tpu.memory_space<vmem>>, vector<16x128xf32>,
    return
  }
  func.func @transform_0(%arg0: i32) -> (i32, i32) {
    %c0_i32 = arith.constant 0 : i32
    %c0_i32_0 = arith.constant 0 : i32
    return %arg0, %c0_i32 : i32, i32
  }
  func.func @transform_1(%arg0: i32) -> (i32, i32) {
    %c0_i32 = arith.constant 0 : i32
    %c0_i32_0 = arith.constant 0 : i32
    %c0_i32_1 = arith.constant 0 : i32
    return %c0_i32, %c0_i32_0 : i32, i32
  }
  func.func @transform_2(%arg0: i32) -> (i32, i32) {
    %c0_i32 = arith.constant 0 : i32
    %c0_i32_0 = arith.constant 0 : i32
    %c0_i32_1 = arith.constant 0 : i32
    return %c0_i32, %c0_i32_0 : i32, i32
  }
  func.func @transform_3(%arg0: i32) -> (i32, i32) {
    %c0_i32 = arith.constant 0 : i32
    %c0_i32_0 = arith.constant 0 : i32
    return %arg0, %c0_i32 : i32, i32
  }
  func.func @transform_4(%arg0: i32) -> (i32, i32) {
    %c0_i32 = arith.constant 0 : i32
    %c0_i32_0 = arith.constant 0 : i32
    return %arg0, %c0_i32 : i32, i32
  }
}

</mosaic_0001>

<llo_original>
// kernel: tpu_custom_call.1
$region0: #{tpu_custom_call.1}
  #allocation0 [shape = 'u32[]', space=smem, size = 0x4, offset = 0x4, fixed_abs, tag = 'smem constant byte address 0x4 - core index']
  #allocation1 [shape = 'u32[144,128]{1,0:T(1,128)}', space=vmem, size = 0x12000, scoped, tag = 'internal scratch']
  %s0 = inlined_call_operand.hbm [shape: f32[2,32], index: 0, kind: input, shape index: {}]
  %s1 = inlined_call_operand.hbm [shape: f32[32,256], index: 1, kind: input, shape index: {}]
  %s2 = inlined_call_operand.vmem [shape: f32[1,256], index: 2, kind: input, shape index: {}]
  %s3 = inlined_call_operand.hbm [shape: f32[2,128], index: 3, kind: output, shape index: {0}]
  %s4 = inlined_call_operand.hbm [shape: f32[2,128], index: 4, kind: output, shape index: {1}]
  %5 = xla_tuple %s3, %s4
  %s6 = sld [smem:[#allocation0]]
  $region38: #{tpu_custom_call.1} parent=0
    _
  %s8 = ssub.s32 1, %s6
  %s9 = scalar_select 0, %s8, %s6
  $region1: #{tpu_custom_call.1} parent=0
    #allocation2 [shape = 'u8[8192]{0}', space=vmem, size = 0x2000, scoped, tag = 'input window, operand 0, single buffered']
    #allocation3 [shape = 's32[1]{0}', space=sflag, size = 0x4, scoped, tag = 'scoped memory for tpu_custom_call.1']
    #allocation4 [shape = 's32[1]{0}', space=sflag, size = 0x4, scoped, tag = 'scoped memory for tpu_custom_call.1']
    #allocation5 [shape = 'u8[32768]{0}', space=vmem, size = 0x8000, scoped, tag = 'input window, operand 1, single buffered']
    #allocation6 [shape = 's32[1]{0}', space=sflag, size = 0x4, scoped, tag = 'scoped memory for tpu_custom_call.1']
    #allocation7 [shape = 'u8[8192]{0}', space=vmem, size = 0x2000, scoped, tag = 'output window, operand 0, single buffered']
    #allocation8 [shape = 'u8[8192]{0}', space=vmem, size = 0x2000, scoped, tag = 'output window, operand 1, single buffered']
    #allocation9 [shape = 's32[1]{0}', space=sflag, size = 0x4, scoped, tag = 'scoped memory for tpu_custom_call.1']
    %10 = vsyncpa [#allocation3], 0
    %11 = vsyncpa [#allocation6], 0
    %12 = vsyncpa [#allocation4], 0
    %13 = vsyncpa [#allocation9], 0
    // Predicated region
    $region2: #{tpu_custom_call.1} parent=1 // pred_check
      _
    $region3: #{tpu_custom_call.1} parent=1 // pred_check_branch
      %15 = sbr.rel (0) target = $region5
    $region4: #{tpu_custom_call.1} parent=1 // pred_region
      %s17 = ssub.s32 256, 32
      %18 = vsyncadd [#allocation3], %s17
      %s19 = sshll.u32 [#allocation2], 4
      %s20 = int_to_ptr.vmem [resolvable:$true] %s19
      %25 = dma.hbm_to_vmem [thread:$0]  %s0, 32, %s20, [#allocation3], 32, 32, 2
    $region5: #{tpu_custom_call.1} parent=1 // pred_fallthru
      _
    // Predicated region
    $region6: #{tpu_custom_call.1} parent=1 // pred_check
      _
    $region7: #{tpu_custom_call.1} parent=1 // pred_check_branch
      %27 = sbr.rel (0) target = $region9
    $region8: #{tpu_custom_call.1} parent=1 // pred_region
      %s29 = ssub.s32 1024, 1024
      %30 = vsyncadd [#allocation6], %s29
      %s31 = sshll.u32 [#allocation5], 4
      %s32 = int_to_ptr.vmem [resolvable:$true] %s31
      %37 = dma.hbm_to_vmem [thread:$0]  %s1, 1024, %s32, [#allocation6], 256, 256, 16
    $region9: #{tpu_custom_call.1} parent=1 // pred_fallthru
      _
    // Predicated region
    $region10: #{tpu_custom_call.1} parent=1 // pred_check
      _
    $region11: #{tpu_custom_call.1} parent=1 // pred_check_branch
      %39 = sbr.rel (0) target = $region13
    $region12: #{tpu_custom_call.1} parent=1 // pred_region
      _
    $region13: #{tpu_custom_call.1} parent=1 // pred_fallthru
      _
    // Predicated region
    $region14: #{tpu_custom_call.1} parent=1 // pred_check
      _
    $region15: #{tpu_custom_call.1} parent=1 // pred_check_branch
      %41 = sbr.rel (0) target = $region17
    $region16: #{tpu_custom_call.1} parent=1 // pred_region
      %42 = dma.done [#allocation3], 256
    $region17: #{tpu_custom_call.1} parent=1 // pred_fallthru
      _
    // Predicated region
    $region18: #{tpu_custom_call.1} parent=1 // pred_check
      _
    $region19: #{tpu_custom_call.1} parent=1 // pred_check_branch
      %44 = sbr.rel (0) target = $region21
    $region20: #{tpu_custom_call.1} parent=1 // pred_region
      %45 = dma.done [#allocation6], 1024
    $region21: #{tpu_custom_call.1} parent=1 // pred_fallthru
      _
    %v46 = vld [vmem:[#allocation2] sm:$0xff]
    %v47 = vld [vmem:[#allocation2 + $0x8] sm:$0xff]
    %v48 = vld [vmem:[#allocation5] sm:$0xff]
    %v49 = vld [vmem:[#allocation5 + $0x8] sm:$0xff]
    %v50 = vld [vmem:[#allocation5 + $0x10] sm:$0xff]
    %v51 = vld [vmem:[#allocation5 + $0x18] sm:$0xff]
    %v52 = vld [vmem:[#allocation5 + $0x20] sm:$0xff]
    %v53 = vld [vmem:[#allocation5 + $0x28] sm:$0xff]
    %v54 = vld [vmem:[#allocation5 + $0x30] sm:$0xff]
    %v55 = vld [vmem:[#allocation5 + $0x38] sm:$0xff]
    %v56 = vld [vmem:[%s2] sm:$0x3]
    %v58 = vlaneseq
    %v59 = vshrl.u32 %v58, 7
    %v60 = vsub.s32 0, %v59
    %v61 = vrot.slane %v56, %v60
    %v62 = vlaneseq
    %v63 = vshrl.u32 %v62, 7
    %v64 = vsub.s32 1, %v63
    %v65 = vrot.slane %v56, %v64
    %vm68 = vcmask 261120
    %v70 = vsel %vm68, %v46, 0
    %v73 = vsel %vm68, %v47, 0
    %75 = vmatprep.subr.mxu0 %v49
    %76 = vmatpush1.msra.mxu0 %v48
    %77 = vmatprep.subr.mxu0 %v51
    %78 = vmatpush1.msra.mxu0 %v50
    %79 = vmatprep.subr.mxu0 %v53
    %80 = vmatpush1.msra.mxu0 %v52
    %81 = vmatprep.subr.mxu0 %v55
    %82 = vmatpush1.msra.mxu0 %v54
    %83 = vmatprep.subr.mxu0 0.0
    %84 = vmatpush1.msra.mxu0 0.0
    %85 = vmatprep.subr.mxu0 0.0
    %86 = vmatpush1.msra.mxu0 0.0
    %87 = vmatprep.subr.mxu0 0.0
    %88 = vmatpush1.msra.mxu0 0.0
    %89 = vmatprep.subr.mxu0 0.0
    %90 = vmatpush1.msra.mxu0 0.0
    %91 = vmatprep.subr.mxu0 0.0
    %92 = vmatpush1.msra.mxu0 0.0
    %93 = vmatprep.subr.mxu0 0.0
    %94 = vmatpush1.msra.mxu0 0.0
    %95 = vmatprep.subr.mxu0 0.0
    %96 = vmatpush1.msra.mxu0 0.0
    %97 = vmatprep.subr.mxu0 0.0
    %98 = vmatpush1.msra.mxu0 0.0
    %99 = vmatprep.subr.mxu0 0.0
    %100 = vmatpush1.msra.mxu0 0.0
    %101 = vmatprep.subr.mxu0 0.0
    %102 = vmatpush1.msra.mxu0 0.0
    %103 = vmatprep.subr.mxu0 0.0
    %104 = vmatpush1.msra.mxu0 0.0
    %105 = vmatprep.subr.mxu0 0.0
    %106 = vmatpush1.msra.mxu0 0.0
    %107 = vmatprep.subr.mxu0 0.0
    %108 = vmatpush1.msra.mxu0 0.0
    %109 = vmatprep.subr.mxu0 0.0
    %110 = vmatpush1.msra.mxu0 0.0
    %111 = vmatprep.subr.mxu0 0.0
    %112 = vmatpush1.msra.mxu0 0.0
    %113 = vmatprep.subr.mxu0 0.0
    %114 = vmatpush1.msra.mxu0 0.0
    %115 = vmatprep.subr.mxu0 0.0
    %116 = vmatpush1.msra.mxu0 0.0
    %117 = vmatprep.subr.mxu0 0.0
    %118 = vmatpush1.msra.mxu0 0.0
    %119 = vmatprep.subr.mxu0 0.0
    %120 = vmatpush1.msra.mxu0 0.0
    %121 = vmatprep.subr.mxu0 0.0
    %122 = vmatpush1.msra.mxu0 0.0
    %123 = vmatprep.subr.mxu0 0.0
    %124 = vmatpush1.msra.mxu0 0.0
    %125 = vmatprep.subr.mxu0 0.0
    %126 = vmatpush1.msra.mxu0 0.0
    %127 = vmatprep.subr.mxu0 0.0
    %128 = vmatpush1.msra.mxu0 0.0
    %129 = vmatprep.subr.mxu0 0.0
    %130 = vmatpush1.msra.mxu0 0.0
    %131 = vmatprep.subr.mxu0 0.0
    %132 = vmatpush1.msra.mxu0 0.0
    %133 = vmatprep.subr.mxu0 0.0
    %134 = vmatpush1.msra.mxu0 0.0
    %135 = vmatprep.subr.mxu0 0.0
    %136 = vmatpush1.msra.mxu0 0.0
    %137 = vmatprep.subr.mxu0 0.0
    %138 = vmatpush1.msra.mxu0 0.0
    %139 = vmatprep.mubr.f32.mxu0 0.0
    %140 = vmatmul.mubr.f32.gmra.mrb[0].mxu0 %v70
    %v141 = vpop.f32.mrb[0].mxu0
    %v142 = vadd.f32 %v61, %v141
    %v143 = vpop.f32.mrb[0].mxu0
    %v144 = vadd.f32 %v65, %v143
    %145 = vmatprep.mubr.f32.mxu0 0.0
    %146 = vmatmul.mubr.f32.gmra.mrb[0].mxu0 %v73
    %v147 = vpop.f32.mrb[0].mxu0
    %v148 = vadd.f32 %v61, %v147
    %v149 = vpop.f32.mrb[0].mxu0
    %v150 = vadd.f32 %v65, %v149
    %151 = vdwg.mxu0
    %152 = vst [vmem:[#allocation7] sm:$0xff] %v142
    %153 = vst [vmem:[#allocation7 + $0x8] sm:$0xff] %v148
    %154 = vst [vmem:[#allocation8] sm:$0xff] %v144
    %155 = vst [vmem:[#allocation8 + $0x8] sm:$0xff] %v150
    // Predicated region
    $region22: #{tpu_custom_call.1} parent=1 // pred_check
      _
    $region23: #{tpu_custom_call.1} parent=1 // pred_check_branch
      %157 = sbr.rel (0) target = $region25
    $region24: #{tpu_custom_call.1} parent=1 // pred_region
      %s159 = ssub.s32 256, 32
      %160 = vsyncadd [#allocation4], %s159
      %s161 = sshll.u32 [#allocation7], 4
      %s162 = int_to_ptr.vmem [resolvable:$true] %s161
      %167 = dma.vmem_to_hbm [thread:$0]  %s162, 32, %s3, [#allocation4], 32, 32, 2
    $region25: #{tpu_custom_call.1} parent=1 // pred_fallthru
      _
    // Predicated region
    $region26: #{tpu_custom_call.1} parent=1 // pred_check
      _
    $region27: #{tpu_custom_call.1} parent=1 // pred_check_branch
      %169 = sbr.rel (0) target = $region29
    $region28: #{tpu_custom_call.1} parent=1 // pred_region
      %s171 = ssub.s32 256, 32
      %172 = vsyncadd [#allocation9], %s171
      %s173 = sshll.u32 [#allocation8], 4
      %s174 = int_to_ptr.vmem [resolvable:$true] %s173
      %179 = dma.vmem_to_hbm [thread:$0]  %s174, 32, %s4, [#allocation9], 32, 32, 2
    $region29: #{tpu_custom_call.1} parent=1 // pred_fallthru
      _
    // Predicated region
    $region30: #{tpu_custom_call.1} parent=1 // pred_check
      _
    $region31: #{tpu_custom_call.1} parent=1 // pred_check_branch
      %181 = sbr.rel (0) target = $region33
    $region32: #{tpu_custom_call.1} parent=1 // pred_region
      %182 = dma.done [#allocation4], 256
    $region33: #{tpu_custom_call.1} parent=1 // pred_fallthru
      _
    // Predicated region
    $region34: #{tpu_custom_call.1} parent=1 // pred_check
      _
    $region35: #{tpu_custom_call.1} parent=1 // pred_check_branch
      %184 = sbr.rel (0) target = $region37
    $region36: #{tpu_custom_call.1} parent=1 // pred_region
      %185 = dma.done [#allocation9], 256
    $region37: #{tpu_custom_call.1} parent=1 // pred_fallthru
      _
    %186 = vsyncpa [#allocation3], 1
    %187 = vsyncpa [#allocation6], 1
    %188 = vsyncpa [#allocation4], 1
    %189 = vsyncpa [#allocation9], 1

</llo_original>
